<compile_context>
chip_gen: v5e
topology: v5e:2x2
jax: 0.10.0
libtpu: 0.0.40
codegen_flags: <defaults>
</compile_context>

<pallas_src>
from functools import partial

import jax
import jax.numpy as jnp
from jax.experimental import pallas as pl
from jax.experimental.pallas import tpu as pltpu


EMBED_DIM = 32
PRED_PAD = 128          # lane-dense width for the predict output slab
NEG_SLOPE = 0.2         # DGL GATConv default leaky-relu slope


def _vmem_spec():
    # Whole-array blocks resident in VMEM (all shapes here are tiny).
    return pl.BlockSpec(memory_space=pltpu.MemorySpace.VMEM)


# ------------------------------ fused kernel ------------------------------- #

def _fused_kernel(feats_ref, adj0_ref, adj1_ref,
                  w_embl_ref, gat_w0_ref, gat_w1_ref, lstm_w_ref,
                  w_pred_ref, biases_ref,
                  out_ref, *, num_layers, n_src0, n_dst0, n_dst1, hid):
    bf16 = jnp.bfloat16
    f32 = jnp.float32
    hp2 = hid + 2

    def mm(a_bf, b_bf):
        # bf16 operands, f32 accumulation on the MXU.
        return jnp.dot(a_bf, b_bf, preferred_element_type=f32)

    # ---- packed bias rows
    b_embl = biases_ref[0:1, :hid]                                    # [1, hid]
    b_pred = biases_ref[2 * num_layers + 1:2 * num_layers + 2, :]     # [1, 128]

    # ---- folded embed∘linear1: ONE matmul on the concatenated [x_src0; feat_dst1]
    proj = mm(feats_ref[...].astype(bf16), w_embl_ref[...]) + b_embl  # [n_tot, hid]
    x = proj[:n_src0, :]                  # GAT hop-0 source features
    xd = proj[n_src0:, :]                 # LSTM x input (layer 0)
    x_bf = x.astype(bf16)
    xd_bf = xd.astype(bf16)

    # ---- batched hop-0 projection for ALL layers: [z0 | el0 | er0] per layer
    z0_all = mm(x_bf, gat_w0_ref[...])    # [n_src0, L*(hid+2)] f32

    # ---- adjacency: int8 {0,1} -> f32 once; single select per hop in f32
    adj0_f = adj0_ref[...].astype(f32)    # [n_dst0, n_src0]
    adj1_f = adj1_ref[...].astype(f32)    # [n_dst1, n_dst0]

    def attend(z, el_col, er_dst, adj_f):
        """Edge softmax + aggregation. z:[n_src,H] f32, el:[n_src,1], er:[n_dst,1]."""
        # el_col.T is a tiny [n_src,1]->[1,n_src] XLU transpose (one vreg here).
        e = er_dst + el_col.T                                # [n_dst, n_src]
        e = jnp.where(e >= 0.0, e, NEG_SLOPE * e)            # leaky relu
        e = jnp.where(adj_f > 0.0, e, -1e30)                 # mask non-edges (f32 select)
        e_max = jnp.max(e, axis=-1, keepdims=True)
        p = jnp.exp(e - e_max)                               # non-edges -> 0
        denom = jnp.sum(p, axis=-1, keepdims=True)
        a = p * pl.reciprocal(denom, approx=True)            # EUP slot, ~free
        return mm(a.astype(bf16), z.astype(bf16))            # [n_dst, hid]

    # ---- interleaved breadth (GAT x2) + depth (LSTM) per layer
    h = jnp.zeros((n_dst1, hid), f32)
    c = jnp.zeros((n_dst1, hid), f32)

    for l in range(num_layers):
        gat_b = biases_ref[1 + l:2 + l, :hid]                           # [1, hid]

        # hop 0 (block 0): slices out of the batched projection slab
        base = l * hp2
        z0 = z0_all[:, base:base + hid]
        el0 = z0_all[:, base + hid:base + hid + 1]
        er0 = z0_all[:n_dst0, base + hid + 1:base + hid + 2]
        t0 = attend(z0, el0, er0, adj0_f) + gat_b                       # [n_dst0, hid]

        # hop 1 (block 1): one fused [hid, hid+2] matmul -> z1 | el1 | er1
        z1_all = mm(t0.astype(bf16), gat_w1_ref[l])                     # [n_dst0, hid+2]
        z1 = z1_all[:, :hid]
        el1 = z1_all[:, hid:hid + 1]
        er1 = z1_all[:n_dst1, hid + 1:hid + 2]
        t1 = attend(z1, el1, er1, adj1_f) + gat_b                       # [n_dst1, hid]

        # depth (LSTM) step: 2 dots against [H, 4H] stacked gate weights
        # (rows 0:H of lstm_w[l] act on t1, rows H:2H act on the x stream;
        #  w_hh folded into the x-stream rows for l >= 1 since x_seq == h).
        w_full = lstm_w_ref[l]                                          # [2H, 4H] bf16
        x_stream = xd_bf if l == 0 else h.astype(bf16)
        gates = (mm(t1.astype(bf16), w_full[:hid, :])
                 + mm(x_stream, w_full[hid:, :])
                 + biases_ref[1 + num_layers + l:2 + num_layers + l, :4 * hid])
        i_g = jax.nn.sigmoid(gates[:, 0 * hid:1 * hid])     # PyTorch order: i, f, g, o
        f_g = jax.nn.sigmoid(gates[:, 1 * hid:2 * hid])
        g_g = jnp.tanh(gates[:, 2 * hid:3 * hid])
        o_g = jax.nn.sigmoid(gates[:, 3 * hid:4 * hid])
        c = f_g * c + i_g * g_g
        h = o_g * jnp.tanh(c)

    # ---- predict: sigmoid(linear(hid -> 1)), written as a lane-dense [N, 128] slab
    pred = jax.nn.sigmoid(mm(h.astype(bf16), w_pred_ref[...]) + b_pred)
    out_ref[...] = pred


# -------------------------- parameter preprocessing ------------------------ #

def _preprocess(params, hid, num_layers):
    """Fold/transpose/stack PyTorch-layout params into kernel-friendly arrays."""
    bf16 = jnp.bfloat16
    f32 = jnp.float32
    L = num_layers
    assert 4 * hid <= PRED_PAD and hid + 2 <= PRED_PAD

    w_e, b_e = params["embed"]          # [32, in_dim], [1, 32]
    w_1, b_1 = params["linear1"]        # [hid, 32],    [1, hid]
    # y = (x W_e^T + b_e) W_1^T + b_1  ==  x (W_1 W_e)^T + (b_e W_1^T + b_1)
    w_embl = (w_1 @ w_e).T.astype(bf16)                  # [in_dim, hid]
    b_embl = (b_e @ w_1.T + b_1).astype(f32)             # [1, hid]

    # GAT: fuse attention vectors into the projection -> [W^T | W^T a_l^T | W^T a_r^T]
    gat_ext = []
    for g in params["gat"]:
        wt = g["w"].T                                    # [hid, hid]
        col_l = wt @ g["attn_l"].T                       # [hid, 1]  (x @ col_l == el)
        col_r = wt @ g["attn_r"].T                       # [hid, 1]  (x @ col_r == er)
        gat_ext.append(jnp.concatenate([wt, col_l, col_r], axis=1))   # [hid, hid+2]
    gat_w0_all = jnp.concatenate(gat_ext, axis=1).astype(bf16)        # [hid, L*(hid+2)]
    gat_w1 = jnp.stack(gat_ext).astype(bf16)                          # [L, hid, hid+2]

    # LSTM: per layer one [2H, 4H] weight; rows 0:H multiply t1 (h_tmp), rows H:2H
    # multiply the x stream; w_hh folded into the x rows for l >= 1 (x_seq == h),
    # and dropped entirely at l == 0 (h starts at zero).
    lstm_w, lstm_b_rows = [], []
    for l, lp in enumerate(params["lstm"]):
        w_ih, w_hh = lp["w_ih"], lp["w_hh"]              # [4H, 2H], [4H, H]
        wa = w_ih[:, :hid].T                             # [H, 4H]  (t1 stream)
        wx = w_ih[:, hid:].T                             # [H, 4H]  (x  stream)
        if l > 0:
            wx = wx + w_hh.T
        lstm_w.append(jnp.concatenate([wa, wx], axis=0))          # [2H, 4H]
        lstm_b_rows.append((lp["b_ih"] + lp["b_hh"]).astype(f32)) # [1, 4H]
    lstm_w = jnp.stack(lstm_w).astype(bf16)                       # [L, 2H, 4H]

    w_p, b_p = params["predict"]                         # [1, hid], [1, 1]
    w_pred = jnp.zeros((hid, PRED_PAD), f32).at[:, :1].set(w_p.T).astype(bf16)

    # Pack every tiny bias row into one [2L+2, 128] f32 blob (fewer DMA descriptors):
    # row 0 = b_embl, rows 1..L = gat bias, rows L+1..2L = lstm bias, row 2L+1 = b_pred.
    biases = jnp.zeros((2 * L + 2, PRED_PAD), f32)
    biases = biases.at[0, :hid].set(b_embl[0])
    for l in range(L):
        biases = biases.at[1 + l, :hid].set(params["gat"][l]["bias"][0])
        biases = biases.at[1 + L + l, :4 * hid].set(lstm_b_rows[l][0])
    biases = biases.at[2 * L + 1, :1].set(b_p[0])

    return w_embl, gat_w0_all, gat_w1, lstm_w, w_pred, biases


# ------------------------------ forward wrapper ----------------------------- #

@partial(jax.jit, static_argnames=("hid_dim", "num_layers"))
def geniepath_lazy_forward(params, adj0, adj1, x_src0, feat_dst1, *,
                           hid_dim, num_layers):
    n_src0, in_dim = x_src0.shape
    n_dst0 = adj0.shape[0]
    n_dst1 = adj1.shape[0]

    # One feature input: [x_src0 ; feat_dst1]; adjacency as int8 {0,1}.
    feats = jnp.concatenate([x_src0, feat_dst1], axis=0)
    adj0_i8 = (adj0 > 0).astype(jnp.int8)
    adj1_i8 = (adj1 > 0).astype(jnp.int8)

    prep = _preprocess(params, hid_dim, num_layers)
    inputs = (feats, adj0_i8, adj1_i8, *prep)

    kernel = partial(_fused_kernel, num_layers=num_layers, n_src0=n_src0,
                     n_dst0=n_dst0, n_dst1=n_dst1, hid=hid_dim)

    # Rough cost estimate so XLA can schedule the surrounding graph around the call.
    L, H = num_layers, hid_dim
    flops = 2 * (n_src0 + n_dst1) * in_dim * H                      # embed∘linear1
    flops += 2 * n_src0 * H * (L * (H + 2))                         # batched hop-0 proj
    flops += L * 2 * (n_dst0 * n_src0 * H                           # hop-0 aggregation
                      + n_dst0 * H * (H + 2)                        # hop-1 projection
                      + n_dst1 * n_dst0 * H                         # hop-1 aggregation
                      + 2 * n_dst1 * H * 4 * H)                     # LSTM gates
    flops += 2 * n_dst1 * H * PRED_PAD                              # predict
    transcendentals = (L * (n_dst0 * n_src0 + n_dst1 * n_dst0 + 6 * n_dst1 * H)
                       + n_dst1 * PRED_PAD)
    bytes_accessed = (sum(int(a.size) * a.dtype.itemsize for a in inputs)
                      + n_dst1 * PRED_PAD * 4)

    out_slab = pl.pallas_call(
        kernel,
        out_shape=jax.ShapeDtypeStruct((n_dst1, PRED_PAD), jnp.float32),
        in_specs=[_vmem_spec()] * len(inputs),
        out_specs=_vmem_spec(),
        compiler_params=pltpu.CompilerParams(vmem_limit_bytes=64 * 1024 * 1024),
        cost_estimate=pl.CostEstimate(flops=int(flops),
                                      transcendentals=int(transcendentals),
                                      bytes_accessed=int(bytes_accessed)),
    )(*inputs)

    return out_slab[:, :1]                               # [N_dst1, 1]


# --------------------------- parameter init (det.) -------------------------- #

def init_params(key, in_dim, hid_dim, num_layers):
    ks = iter(jax.random.split(key, 6 + 8 * num_layers))

    def nrm(shape, scale=0.1):
        return scale * jax.random.normal(next(ks), shape, jnp.float32)

    params = {
        "embed":   (nrm((EMBED_DIM, in_dim)), nrm((1, EMBED_DIM))),
        "linear1": (nrm((hid_dim, EMBED_DIM)), nrm((1, hid_dim))),
        "predict": (nrm((1, hid_dim)), nrm((1, 1))),
        "gat": [],
        "lstm": [],
    }
    for _ in range(num_layers):
        params["gat"].append({
            "w":      nrm((hid_dim, hid_dim)),   # GATConv fc (no bias)
            "attn_l": nrm((1, hid_dim)),
            "attn_r": nrm((1, hid_dim)),
            "bias":   nrm((1, hid_dim)),         # GATConv output bias
        })
        params["lstm"].append({
            "w_ih": nrm((4 * hid_dim, 2 * hid_dim)),
            "w_hh": nrm((4 * hid_dim, hid_dim)),
            "b_ih": nrm((1, 4 * hid_dim)),
            "b_hh": nrm((1, 4 * hid_dim)),
        })
    return params


# ------------------------ pure-JAX reference (f32) -------------------------- #

def _reference_forward(params, adj0, adj1, x_src0, feat_dst1, hid):
    def linear(x, w, b):
        return x @ w.T + b

    def gat(x, gp, adj):
        n_dst = adj.shape[0]
        z = x @ gp["w"].T
        el = jnp.sum(z * gp["attn_l"], -1, keepdims=True)
        er = jnp.sum(z[:n_dst] * gp["attn_r"], -1, keepdims=True)
        e = er + el.T
        e = jnp.where(e >= 0, e, NEG_SLOPE * e)
        e = jnp.where(adj > 0, e, -1e30)
        e = e - jnp.max(e, -1, keepdims=True)
        p = jnp.where(adj > 0, jnp.exp(e), 0.0)
        a = p / jnp.sum(p, -1, keepdims=True)
        return a @ z + gp["bias"]

    x = linear(linear(x_src0, *params["embed"]), *params["linear1"])
    h_tmps = []
    for gp in params["gat"]:
        t = gat(x, gp, adj0)
        t = gat(t, gp, adj1)
        h_tmps.append(t)
    xd = linear(linear(feat_dst1, *params["embed"]), *params["linear1"])
    n_dst1 = adj1.shape[0]
    h = jnp.zeros((n_dst1, hid))
    c = jnp.zeros((n_dst1, hid))
    xs = xd
    for t, lp in zip(h_tmps, params["lstm"]):
        inp = jnp.concatenate([t, xs], -1)
        gates = inp @ lp["w_ih"].T + lp["b_ih"] + h @ lp["w_hh"].T + lp["b_hh"]
        i = jax.nn.sigmoid(gates[:, :hid])
        f = jax.nn.sigmoid(gates[:, hid:2 * hid])
        g = jnp.tanh(gates[:, 2 * hid:3 * hid])
        o = jax.nn.sigmoid(gates[:, 3 * hid:])
        c = f * c + i * g
        h = o * jnp.tanh(c)
        xs = h
    return jax.nn.sigmoid(linear(xs, *params["predict"]))


# ----------------------------------- main ----------------------------------- #

if __name__ == "__main__":
    in_dim, hid_dim, num_layers = 8, 16, 2
    n_src0, n_dst0, n_dst1 = 12, 8, 4   # DGL block convention: dst is prefix of src

    key = jax.random.PRNGKey(0)
    k_adj0, k_adj1, k_x, k_par = jax.random.split(key, 4)

    # Synthetic graph blocks as dense masks adj[dst, src]; guarantee >=1 edge/dst.
    adj0 = (jax.random.uniform(k_adj0, (n_dst0, n_src0)) < 0.4).astype(jnp.float32)
    adj0 = jnp.maximum(adj0, jnp.eye(n_dst0, n_src0, dtype=jnp.float32))
    adj1 = (jax.random.uniform(k_adj1, (n_dst1, n_dst0)) < 0.5).astype(jnp.float32)
    adj1 = jnp.maximum(adj1, jnp.eye(n_dst1, n_dst0, dtype=jnp.float32))

    # Node features; blocks[1].dstdata['feature'] is the prefix of the src features.
    x_src0 = jax.random.normal(k_x, (n_src0, in_dim), jnp.float32)
    feat_dst1 = x_src0[:n_dst1]

    params = init_params(k_par, in_dim, hid_dim, num_layers)

    out = geniepath_lazy_forward(params, adj0, adj1, x_src0, feat_dst1,
                                 hid_dim=hid_dim, num_layers=num_layers)
    out = jax.block_until_ready(out)

    ref = _reference_forward(params, adj0, adj1, x_src0, feat_dst1, hid_dim)
    assert out.shape == (n_dst1, 1)
    assert bool(jnp.all(jnp.isfinite(out)))
    # bf16 matmul operands with f32 accumulation -> small numeric drift vs f32 ref.
    assert bool(jnp.allclose(out, ref, atol=2e-2)), (out, ref)
    print("KERNEL_OK")
</pallas_src>

<mosaic_0001>
module attributes {stable_mosaic.version = 11 : i64} {
  func.func @_fused_kernel(%arg0: memref<16x8xf32, #tpu.memory_space<vmem>>, %arg1: memref<8x12xi8, #tpu.memory_space<vmem>>, %arg2: memref<4x8xi8, #tpu.memory_space<vmem>>, %arg3: memref<8x16xbf16, #tpu.memory_space<vmem>>, %arg4: memref<16x36xbf16, #tpu.memory_space<vmem>>, %arg5: memref<2x16x18xbf16, #tpu.memory_space<vmem>>, %arg6: memref<2x32x64xbf16, #tpu.memory_space<vmem>>, %arg7: memref<16x128xbf16, #tpu.memory_space<vmem>>, %arg8: memref<6x128xf32, #tpu.memory_space<vmem>>, %arg9: memref<4x128xf32, #tpu.memory_space<vmem>>) attributes {dimension_semantics = [], scalar_prefetch = 0 : i64, scratch_operands = 0 : i64, tpu.core_type = #tpu.core_type<tc>} {
    %c0 = arith.constant 0 : index
    %c0_0 = arith.constant 0 : index
    %0 = vector.load %arg8[%c0, %c0_0] : memref<6x128xf32, #tpu.memory_space<vmem>>, vector<1x16xf32>
    %c5 = arith.constant 5 : index
    %c0_1 = arith.constant 0 : index
    %1 = vector.load %arg8[%c5, %c0_1] : memref<6x128xf32, #tpu.memory_space<vmem>>, vector<1x128xf32>
    %c0_2 = arith.constant 0 : index
    %c0_3 = arith.constant 0 : index
    %2 = vector.load %arg0[%c0_2, %c0_3] : memref<16x8xf32, #tpu.memory_space<vmem>>, vector<16x8xf32>
    %3 = arith.truncf %2 : vector<16x8xf32> to vector<16x8xbf16>
    %c0_4 = arith.constant 0 : index
    %c0_5 = arith.constant 0 : index
    %4 = vector.load %arg3[%c0_4, %c0_5] : memref<8x16xbf16, #tpu.memory_space<vmem>>, vector<8x16xbf16>
    %cst = arith.constant dense<0.000000e+00> : vector<16x16xf32>
    %5 = tpu.matmul %3, %4, %cst {dimension_numbers = #tpu.dot_dimension_numbers<[1], [0], [0], [1], [0, 0, 1, 1], [], []>} : vector<16x8xbf16>, vector<8x16xbf16>, vector<16x16xf32> -> vector<16x16xf32>
    %6 = vector.broadcast %0 : vector<1x16xf32> to vector<16x16xf32>
    %7 = arith.addf %5, %6 : vector<16x16xf32>
    %8 = vector.extract_strided_slice %7 {offsets = [0, 0], sizes = [12, 16], strides = [1, 1]} : vector<16x16xf32> to vector<12x16xf32>
    %9 = vector.extract_strided_slice %7 {offsets = [12, 0], sizes = [4, 16], strides = [1, 1]} : vector<16x16xf32> to vector<4x16xf32>
    %10 = arith.truncf %8 : vector<12x16xf32> to vector<12x16xbf16>
    %11 = arith.truncf %9 : vector<4x16xf32> to vector<4x16xbf16>
    %c0_6 = arith.constant 0 : index
    %c0_7 = arith.constant 0 : index
    %12 = vector.load %arg4[%c0_6, %c0_7] : memref<16x36xbf16, #tpu.memory_space<vmem>>, vector<16x36xbf16>
    %cst_8 = arith.constant dense<0.000000e+00> : vector<12x36xf32>
    %13 = tpu.matmul %10, %12, %cst_8 {dimension_numbers = #tpu.dot_dimension_numbers<[1], [0], [0], [1], [0, 0, 1, 1], [], []>} : vector<12x16xbf16>, vector<16x36xbf16>, vector<12x36xf32> -> vector<12x36xf32>
    %c0_9 = arith.constant 0 : index
    %c0_10 = arith.constant 0 : index
    %14 = vector.load %arg1[%c0_9, %c0_10] : memref<8x12xi8, #tpu.memory_space<vmem>>, vector<8x12xi8>
    %15 = arith.sitofp %14 : vector<8x12xi8> to vector<8x12xf32>
    %c0_11 = arith.constant 0 : index
    %c0_12 = arith.constant 0 : index
    %16 = vector.load %arg2[%c0_11, %c0_12] : memref<4x8xi8, #tpu.memory_space<vmem>>, vector<4x8xi8>
    %17 = arith.sitofp %16 : vector<4x8xi8> to vector<4x8xf32>
    %cst_13 = arith.constant 0.000000e+00 : f32
    %18 = vector.broadcast %cst_13 : f32 to vector<4x16xf32>
    %c1 = arith.constant 1 : index
    %c0_14 = arith.constant 0 : index
    %19 = vector.load %arg8[%c1, %c0_14] : memref<6x128xf32, #tpu.memory_space<vmem>>, vector<1x16xf32>
    %20 = vector.extract_strided_slice %13 {offsets = [0, 0], sizes = [12, 16], strides = [1, 1]} : vector<12x36xf32> to vector<12x16xf32>
    %21 = vector.extract_strided_slice %13 {offsets = [0, 16], sizes = [12, 1], strides = [1, 1]} : vector<12x36xf32> to vector<12x1xf32>
    %22 = vector.extract_strided_slice %13 {offsets = [0, 17], sizes = [8, 1], strides = [1, 1]} : vector<12x36xf32> to vector<8x1xf32>
    %23 = tpu.transpose %21, [1, 0] : vector<12x1xf32> -> vector<1x12xf32>
    %24 = vector.broadcast %22 : vector<8x1xf32> to vector<8x12xf32>
    %25 = vector.broadcast %23 : vector<1x12xf32> to vector<8x12xf32>
    %26 = arith.addf %24, %25 : vector<8x12xf32>
    %cst_15 = arith.constant 0.000000e+00 : f32
    %27 = vector.broadcast %cst_15 : f32 to vector<8x12xf32>
    %28 = arith.cmpf oge, %26, %27 : vector<8x12xf32>
    %cst_16 = arith.constant 2.000000e-01 : f32
    %29 = vector.broadcast %cst_16 : f32 to vector<8x12xf32>
    %30 = arith.mulf %29, %26 : vector<8x12xf32>
    %31 = arith.select %28, %26, %30 : vector<8x12xi1>, vector<8x12xf32>
    %cst_17 = arith.constant 0.000000e+00 : f32
    %32 = vector.broadcast %cst_17 : f32 to vector<8x12xf32>
    %33 = arith.cmpf ogt, %15, %32 : vector<8x12xf32>
    %cst_18 = arith.constant -1.000000e+30 : f32
    %34 = vector.broadcast %cst_18 : f32 to vector<8x12xf32>
    %35 = arith.select %33, %31, %34 : vector<8x12xi1>, vector<8x12xf32>
    %cst_19 = arith.constant dense<0xFF800000> : vector<8xf32>
    %36 = vector.multi_reduction <maximumf>, %35, %cst_19 [1] : vector<8x12xf32> to vector<8xf32>
    %37 = vector.shape_cast %36 : vector<8xf32> to vector<8x1xf32>
    %38 = vector.broadcast %37 : vector<8x1xf32> to vector<8x12xf32>
    %39 = arith.subf %35, %38 : vector<8x12xf32>
    %40 = math.exp %39 : vector<8x12xf32>
    %cst_20 = arith.constant dense<0.000000e+00> : vector<8xf32>
    %41 = vector.multi_reduction <add>, %40, %cst_20 [1] : vector<8x12xf32> to vector<8xf32>
    %42 = vector.shape_cast %41 : vector<8xf32> to vector<8x1xf32>
    %43 = tpu.reciprocal %42 {approx = true} : vector<8x1xf32> -> vector<8x1xf32>
    %44 = vector.broadcast %43 : vector<8x1xf32> to vector<8x12xf32>
    %45 = arith.mulf %40, %44 : vector<8x12xf32>
    %46 = arith.truncf %45 : vector<8x12xf32> to vector<8x12xbf16>
    %47 = arith.truncf %20 : vector<12x16xf32> to vector<12x16xbf16>
    %cst_21 = arith.constant dense<0.000000e+00> : vector<8x16xf32>
    %48 = tpu.matmul %46, %47, %cst_21 {dimension_numbers = #tpu.dot_dimension_numbers<[1], [0], [0], [1], [0, 0, 1, 1], [], []>} : vector<8x12xbf16>, vector<12x16xbf16>, vector<8x16xf32> -> vector<8x16xf32>
    %49 = vector.broadcast %19 : vector<1x16xf32> to vector<8x16xf32>
    %50 = arith.addf %48, %49 : vector<8x16xf32>
    %51 = arith.truncf %50 : vector<8x16xf32> to vector<8x16xbf16>
    %c0_22 = arith.constant 0 : index
    %c0_23 = arith.constant 0 : index
    %c0_24 = arith.constant 0 : index
    %52 = vector.load %arg5[%c0_22, %c0_23, %c0_24] : memref<2x16x18xbf16, #tpu.memory_space<vmem>>, vector<1x16x18xbf16>
    %53 = vector.shape_cast %52 : vector<1x16x18xbf16> to vector<16x18xbf16>
    %cst_25 = arith.constant dense<0.000000e+00> : vector<8x18xf32>
    %54 = tpu.matmul %51, %53, %cst_25 {dimension_numbers = #tpu.dot_dimension_numbers<[1], [0], [0], [1], [0, 0, 1, 1], [], []>} : vector<8x16xbf16>, vector<16x18xbf16>, vector<8x18xf32> -> vector<8x18xf32>
    %55 = vector.extract_strided_slice %54 {offsets = [0, 0], sizes = [8, 16], strides = [1, 1]} : vector<8x18xf32> to vector<8x16xf32>
    %56 = vector.extract_strided_slice %54 {offsets = [0, 16], sizes = [8, 1], strides = [1, 1]} : vector<8x18xf32> to vector<8x1xf32>
    %57 = vector.extract_strided_slice %54 {offsets = [0, 17], sizes = [4, 1], strides = [1, 1]} : vector<8x18xf32> to vector<4x1xf32>
    %58 = tpu.transpose %56, [1, 0] : vector<8x1xf32> -> vector<1x8xf32>
    %59 = vector.broadcast %57 : vector<4x1xf32> to vector<4x8xf32>
    %60 = vector.broadcast %58 : vector<1x8xf32> to vector<4x8xf32>
    %61 = arith.addf %59, %60 : vector<4x8xf32>
    %cst_26 = arith.constant 0.000000e+00 : f32
    %62 = vector.broadcast %cst_26 : f32 to vector<4x8xf32>
    %63 = arith.cmpf oge, %61, %62 : vector<4x8xf32>
    %cst_27 = arith.constant 2.000000e-01 : f32
    %64 = vector.broadcast %cst_27 : f32 to vector<4x8xf32>
    %65 = arith.mulf %64, %61 : vector<4x8xf32>
    %66 = arith.select %63, %61, %65 : vector<4x8xi1>, vector<4x8xf32>
    %cst_28 = arith.constant 0.000000e+00 : f32
    %67 = vector.broadcast %cst_28 : f32 to vector<4x8xf32>
    %68 = arith.cmpf ogt, %17, %67 : vector<4x8xf32>
    %cst_29 = arith.constant -1.000000e+30 : f32
    %69 = vector.broadcast %cst_29 : f32 to vector<4x8xf32>
    %70 = arith.select %68, %66, %69 : vector<4x8xi1>, vector<4x8xf32>
    %cst_30 = arith.constant dense<0xFF800000> : vector<4xf32>
    %71 = vector.multi_reduction <maximumf>, %70, %cst_30 [1] : vector<4x8xf32> to vector<4xf32>
    %72 = vector.shape_cast %71 : vector<4xf32> to vector<4x1xf32>
    %73 = vector.broadcast %72 : vector<4x1xf32> to vector<4x8xf32>
    %74 = arith.subf %70, %73 : vector<4x8xf32>
    %75 = math.exp %74 : vector<4x8xf32>
    %cst_31 = arith.constant dense<0.000000e+00> : vector<4xf32>
    %76 = vector.multi_reduction <add>, %75, %cst_31 [1] : vector<4x8xf32> to vector<4xf32>
    %77 = vector.shape_cast %76 : vector<4xf32> to vector<4x1xf32>
    %78 = tpu.reciprocal %77 {approx = true} : vector<4x1xf32> -> vector<4x1xf32>
    %79 = vector.broadcast %78 : vector<4x1xf32> to vector<4x8xf32>
    %80 = arith.mulf %75, %79 : vector<4x8xf32>
    %81 = arith.truncf %80 : vector<4x8xf32> to vector<4x8xbf16>
    %82 = arith.truncf %55 : vector<8x16xf32> to vector<8x16xbf16>
    %cst_32 = arith.constant dense<0.000000e+00> : vector<4x16xf32>
    %83 = tpu.matmul %81, %82, %cst_32 {dimension_numbers = #tpu.dot_dimension_numbers<[1], [0], [0], [1], [0, 0, 1, 1], [], []>} : vector<4x8xbf16>, vector<8x16xbf16>, vector<4x16xf32> -> vector<4x16xf32>
    %84 = vector.broadcast %19 : vector<1x16xf32> to vector<4x16xf32>
    %85 = arith.addf %83, %84 : vector<4x16xf32>
    %c0_33 = arith.constant 0 : index
    %c0_34 = arith.constant 0 : index
    %c0_35 = arith.constant 0 : index
    %86 = vector.load %arg6[%c0_33, %c0_34, %c0_35] : memref<2x32x64xbf16, #tpu.memory_space<vmem>>, vector<1x32x64xbf16>
    %87 = vector.shape_cast %86 : vector<1x32x64xbf16> to vector<32x64xbf16>
    %88 = arith.truncf %85 : vector<4x16xf32> to vector<4x16xbf16>
    %89 = vector.extract_strided_slice %87 {offsets = [0, 0], sizes = [16, 64], strides = [1, 1]} : vector<32x64xbf16> to vector<16x64xbf16>
    %cst_36 = arith.constant dense<0.000000e+00> : vector<4x64xf32>
    %90 = tpu.matmul %88, %89, %cst_36 {dimension_numbers = #tpu.dot_dimension_numbers<[1], [0], [0], [1], [0, 0, 1, 1], [], []>} : vector<4x16xbf16>, vector<16x64xbf16>, vector<4x64xf32> -> vector<4x64xf32>
    %91 = vector.extract_strided_slice %87 {offsets = [16, 0], sizes = [16, 64], strides = [1, 1]} : vector<32x64xbf16> to vector<16x64xbf16>
    %cst_37 = arith.constant dense<0.000000e+00> : vector<4x64xf32>
    %92 = tpu.matmul %11, %91, %cst_37 {dimension_numbers = #tpu.dot_dimension_numbers<[1], [0], [0], [1], [0, 0, 1, 1], [], []>} : vector<4x16xbf16>, vector<16x64xbf16>, vector<4x64xf32> -> vector<4x64xf32>
    %93 = arith.addf %90, %92 : vector<4x64xf32>
    %c3 = arith.constant 3 : index
    %c0_38 = arith.constant 0 : index
    %94 = vector.load %arg8[%c3, %c0_38] : memref<6x128xf32, #tpu.memory_space<vmem>>, vector<1x64xf32>
    %95 = vector.broadcast %94 : vector<1x64xf32> to vector<4x64xf32>
    %96 = arith.addf %93, %95 : vector<4x64xf32>
    %97 = vector.extract_strided_slice %96 {offsets = [0, 0], sizes = [4, 16], strides = [1, 1]} : vector<4x64xf32> to vector<4x16xf32>
    %98 = arith.negf %97 : vector<4x16xf32>
    %99 = math.exp %98 : vector<4x16xf32>
    %cst_39 = arith.constant 1.000000e+00 : f32
    %100 = vector.broadcast %cst_39 : f32 to vector<4x16xf32>
    %101 = arith.addf %100, %99 : vector<4x16xf32>
    %102 = arith.divf %100, %101 : vector<4x16xf32>
    %103 = vector.extract_strided_slice %96 {offsets = [0, 16], sizes = [4, 16], strides = [1, 1]} : vector<4x64xf32> to vector<4x16xf32>
    %104 = arith.negf %103 : vector<4x16xf32>
    %105 = math.exp %104 : vector<4x16xf32>
    %cst_40 = arith.constant 1.000000e+00 : f32
    %106 = vector.broadcast %cst_40 : f32 to vector<4x16xf32>
    %107 = arith.addf %106, %105 : vector<4x16xf32>
    %108 = arith.divf %106, %107 : vector<4x16xf32>
    %109 = vector.extract_strided_slice %96 {offsets = [0, 32], sizes = [4, 16], strides = [1, 1]} : vector<4x64xf32> to vector<4x16xf32>
    %110 = math.tanh %109 : vector<4x16xf32>
    %111 = vector.extract_strided_slice %96 {offsets = [0, 48], sizes = [4, 16], strides = [1, 1]} : vector<4x64xf32> to vector<4x16xf32>
    %112 = arith.negf %111 : vector<4x16xf32>
    %113 = math.exp %112 : vector<4x16xf32>
    %cst_41 = arith.constant 1.000000e+00 : f32
    %114 = vector.broadcast %cst_41 : f32 to vector<4x16xf32>
    %115 = arith.addf %114, %113 : vector<4x16xf32>
    %116 = arith.divf %114, %115 : vector<4x16xf32>
    %117 = arith.mulf %108, %18 : vector<4x16xf32>
    %118 = arith.mulf %102, %110 : vector<4x16xf32>
    %119 = arith.addf %117, %118 : vector<4x16xf32>
    %120 = math.tanh %119 : vector<4x16xf32>
    %121 = arith.mulf %116, %120 : vector<4x16xf32>
    %c2 = arith.constant 2 : index
    %c0_42 = arith.constant 0 : index
    %122 = vector.load %arg8[%c2, %c0_42] : memref<6x128xf32, #tpu.memory_space<vmem>>, vector<1x16xf32>
    %123 = vector.extract_strided_slice %13 {offsets = [0, 18], sizes = [12, 16], strides = [1, 1]} : vector<12x36xf32> to vector<12x16xf32>
    %124 = vector.extract_strided_slice %13 {offsets = [0, 34], sizes = [12, 1], strides = [1, 1]} : vector<12x36xf32> to vector<12x1xf32>
    %125 = vector.extract_strided_slice %13 {offsets = [0, 35], sizes = [8, 1], strides = [1, 1]} : vector<12x36xf32> to vector<8x1xf32>
    %126 = tpu.transpose %124, [1, 0] : vector<12x1xf32> -> vector<1x12xf32>
    %127 = vector.broadcast %125 : vector<8x1xf32> to vector<8x12xf32>
    %128 = vector.broadcast %126 : vector<1x12xf32> to vector<8x12xf32>
    %129 = arith.addf %127, %128 : vector<8x12xf32>
    %cst_43 = arith.constant 0.000000e+00 : f32
    %130 = vector.broadcast %cst_43 : f32 to vector<8x12xf32>
    %131 = arith.cmpf oge, %129, %130 : vector<8x12xf32>
    %cst_44 = arith.constant 2.000000e-01 : f32
    %132 = vector.broadcast %cst_44 : f32 to vector<8x12xf32>
    %133 = arith.mulf %132, %129 : vector<8x12xf32>
    %134 = arith.select %131, %129, %133 : vector<8x12xi1>, vector<8x12xf32>
    %cst_45 = arith.constant 0.000000e+00 : f32
    %135 = vector.broadcast %cst_45 : f32 to vector<8x12xf32>
    %136 = arith.cmpf ogt, %15, %135 : vector<8x12xf32>
    %cst_46 = arith.constant -1.000000e+30 : f32
    %137 = vector.broadcast %cst_46 : f32 to vector<8x12xf32>
    %138 = arith.select %136, %134, %137 : vector<8x12xi1>, vector<8x12xf32>
    %cst_47 = arith.constant dense<0xFF800000> : vector<8xf32>
    %139 = vector.multi_reduction <maximumf>, %138, %cst_47 [1] : vector<8x12xf32> to vector<8xf32>
    %140 = vector.shape_cast %139 : vector<8xf32> to vector<8x1xf32>
    %141 = vector.broadcast %140 : vector<8x1xf32> to vector<8x12xf32>
    %142 = arith.subf %138, %141 : vector<8x12xf32>
    %143 = math.exp %142 : vector<8x12xf32>
    %cst_48 = arith.constant dense<0.000000e+00> : vector<8xf32>
    %144 = vector.multi_reduction <add>, %143, %cst_48 [1] : vector<8x12xf32> to vector<8xf32>
    %145 = vector.shape_cast %144 : vector<8xf32> to vector<8x1xf32>
    %146 = tpu.reciprocal %145 {approx = true} : vector<8x1xf32> -> vector<8x1xf32>
    %147 = vector.broadcast %146 : vector<8x1xf32> to vector<8x12xf32>
    %148 = arith.mulf %143, %147 : vector<8x12xf32>
    %149 = arith.truncf %148 : vector<8x12xf32> to vector<8x12xbf16>
    %150 = arith.truncf %123 : vector<12x16xf32> to vector<12x16xbf16>
    %cst_49 = arith.constant dense<0.000000e+00> : vector<8x16xf32>
    %151 = tpu.matmul %149, %150, %cst_49 {dimension_numbers = #tpu.dot_dimension_numbers<[1], [0], [0], [1], [0, 0, 1, 1], [], []>} : vector<8x12xbf16>, vector<12x16xbf16>, vector<8x16xf32> -> vector<8x16xf32>
    %152 = vector.broadcast %122 : vector<1x16xf32> to vector<8x16xf32>
    %153 = arith.addf %151, %152 : vector<8x16xf32>
    %154 = arith.truncf %153 : vector<8x16xf32> to vector<8x16xbf16>
    %c1_50 = arith.constant 1 : index
    %c0_51 = arith.constant 0 : index
    %c0_52 = arith.constant 0 : index
    %155 = vector.load %arg5[%c1_50, %c0_51, %c0_52] : memref<2x16x18xbf16, #tpu.memory_space<vmem>>, vector<1x16x18xbf16>
    %156 = vector.shape_cast %155 : vector<1x16x18xbf16> to vector<16x18xbf16>
    %cst_53 = arith.constant dense<0.000000e+00> : vector<8x18xf32>
    %157 = tpu.matmul %154, %156, %cst_53 {dimension_numbers = #tpu.dot_dimension_numbers<[1], [0], [0], [1], [0, 0, 1, 1], [], []>} : vector<8x16xbf16>, vector<16x18xbf16>, vector<8x18xf32> -> vector<8x18xf32>
    %158 = vector.extract_strided_slice %157 {offsets = [0, 0], sizes = [8, 16], strides = [1, 1]} : vector<8x18xf32> to vector<8x16xf32>
    %159 = vector.extract_strided_slice %157 {offsets = [0, 16], sizes = [8, 1], strides = [1, 1]} : vector<8x18xf32> to vector<8x1xf32>
    %160 = vector.extract_strided_slice %157 {offsets = [0, 17], sizes = [4, 1], strides = [1, 1]} : vector<8x18xf32> to vector<4x1xf32>
    %161 = tpu.transpose %159, [1, 0] : vector<8x1xf32> -> vector<1x8xf32>
    %162 = vector.broadcast %160 : vector<4x1xf32> to vector<4x8xf32>
    %163 = vector.broadcast %161 : vector<1x8xf32> to vector<4x8xf32>
    %164 = arith.addf %162, %163 : vector<4x8xf32>
    %cst_54 = arith.constant 0.000000e+00 : f32
    %165 = vector.broadcast %cst_54 : f32 to vector<4x8xf32>
    %166 = arith.cmpf oge, %164, %165 : vector<4x8xf32>
    %cst_55 = arith.constant 2.000000e-01 : f32
    %167 = vector.broadcast %cst_55 : f32 to vector<4x8xf32>
    %168 = arith.mulf %167, %164 : vector<4x8xf32>
    %169 = arith.select %166, %164, %168 : vector<4x8xi1>, vector<4x8xf32>
    %cst_56 = arith.constant 0.000000e+00 : f32
    %170 = vector.broadcast %cst_56 : f32 to vector<4x8xf32>
    %171 = arith.cmpf ogt, %17, %170 : vector<4x8xf32>
    %cst_57 = arith.constant -1.000000e+30 : f32
    %172 = vector.broadcast %cst_57 : f32 to vector<4x8xf32>
    %173 = arith.select %171, %169, %172 : vector<4x8xi1>, vector<4x8xf32>
    %cst_58 = arith.constant dense<0xFF800000> : vector<4xf32>
    %174 = vector.multi_reduction <maximumf>, %173, %cst_58 [1] : vector<4x8xf32> to vector<4xf32>
    %175 = vector.shape_cast %174 : vector<4xf32> to vector<4x1xf32>
    %176 = vector.broadcast %175 : vector<4x1xf32> to vector<4x8xf32>
    %177 = arith.subf %173, %176 : vector<4x8xf32>
    %178 = math.exp %177 : vector<4x8xf32>
    %cst_59 = arith.constant dense<0.000000e+00> : vector<4xf32>
    %179 = vector.multi_reduction <add>, %178, %cst_59 [1] : vector<4x8xf32> to vector<4xf32>
    %180 = vector.shape_cast %179 : vector<4xf32> to vector<4x1xf32>
    %181 = tpu.reciprocal %180 {approx = true} : vector<4x1xf32> -> vector<4x1xf32>
    %182 = vector.broadcast %181 : vector<4x1xf32> to vector<4x8xf32>
    %183 = arith.mulf %178, %182 : vector<4x8xf32>
    %184 = arith.truncf %183 : vector<4x8xf32> to vector<4x8xbf16>
    %185 = arith.truncf %158 : vector<8x16xf32> to vector<8x16xbf16>
    %cst_60 = arith.constant dense<0.000000e+00> : vector<4x16xf32>
    %186 = tpu.matmul %184, %185, %cst_60 {dimension_numbers = #tpu.dot_dimension_numbers<[1], [0], [0], [1], [0, 0, 1, 1], [], []>} : vector<4x8xbf16>, vector<8x16xbf16>, vector<4x16xf32> -> vector<4x16xf32>
    %187 = vector.broadcast %122 : vector<1x16xf32> to vector<4x16xf32>
    %188 = arith.addf %186, %187 : vector<4x16xf32>
    %c1_61 = arith.constant 1 : index
    %c0_62 = arith.constant 0 : index
    %c0_63 = arith.constant 0 : index
    %189 = vector.load %arg6[%c1_61, %c0_62, %c0_63] : memref<2x32x64xbf16, #tpu.memory_space<vmem>>, vector<1x32x64xbf16>
    %190 = vector.shape_cast %189 : vector<1x32x64xbf16> to vector<32x64xbf16>
    %191 = arith.truncf %121 : vector<4x16xf32> to vector<4x16xbf16>
    %192 = arith.truncf %188 : vector<4x16xf32> to vector<4x16xbf16>
    %193 = vector.extract_strided_slice %190 {offsets = [0, 0], sizes = [16, 64], strides = [1, 1]} : vector<32x64xbf16> to vector<16x64xbf16>
    %cst_64 = arith.constant dense<0.000000e+00> : vector<4x64xf32>
    %194 = tpu.matmul %192, %193, %cst_64 {dimension_numbers = #tpu.dot_dimension_numbers<[1], [0], [0], [1], [0, 0, 1, 1], [], []>} : vector<4x16xbf16>, vector<16x64xbf16>, vector<4x64xf32> -> vector<4x64xf32>
    %195 = vector.extract_strided_slice %190 {offsets = [16, 0], sizes = [16, 64], strides = [1, 1]} : vector<32x64xbf16> to vector<16x64xbf16>
    %cst_65 = arith.constant dense<0.000000e+00> : vector<4x64xf32>
    %196 = tpu.matmul %191, %195, %cst_65 {dimension_numbers = #tpu.dot_dimension_numbers<[1], [0], [0], [1], [0, 0, 1, 1], [], []>} : vector<4x16xbf16>, vector<16x64xbf16>, vector<4x64xf32> -> vector<4x64xf32>
    %197 = arith.addf %194, %196 : vector<4x64xf32>
    %c4 = arith.constant 4 : index
    %c0_66 = arith.constant 0 : index
    %198 = vector.load %arg8[%c4, %c0_66] : memref<6x128xf32, #tpu.memory_space<vmem>>, vector<1x64xf32>
    %199 = vector.broadcast %198 : vector<1x64xf32> to vector<4x64xf32>
    %200 = arith.addf %197, %199 : vector<4x64xf32>
    %201 = vector.extract_strided_slice %200 {offsets = [0, 0], sizes = [4, 16], strides = [1, 1]} : vector<4x64xf32> to vector<4x16xf32>
    %202 = arith.negf %201 : vector<4x16xf32>
    %203 = math.exp %202 : vector<4x16xf32>
    %cst_67 = arith.constant 1.000000e+00 : f32
    %204 = vector.broadcast %cst_67 : f32 to vector<4x16xf32>
    %205 = arith.addf %204, %203 : vector<4x16xf32>
    %206 = arith.divf %204, %205 : vector<4x16xf32>
    %207 = vector.extract_strided_slice %200 {offsets = [0, 16], sizes = [4, 16], strides = [1, 1]} : vector<4x64xf32> to vector<4x16xf32>
    %208 = arith.negf %207 : vector<4x16xf32>
    %209 = math.exp %208 : vector<4x16xf32>
    %cst_68 = arith.constant 1.000000e+00 : f32
    %210 = vector.broadcast %cst_68 : f32 to vector<4x16xf32>
    %211 = arith.addf %210, %209 : vector<4x16xf32>
    %212 = arith.divf %210, %211 : vector<4x16xf32>
    %213 = vector.extract_strided_slice %200 {offsets = [0, 32], sizes = [4, 16], strides = [1, 1]} : vector<4x64xf32> to vector<4x16xf32>
    %214 = math.tanh %213 : vector<4x16xf32>
    %215 = vector.extract_strided_slice %200 {offsets = [0, 48], sizes = [4, 16], strides = [1, 1]} : vector<4x64xf32> to vector<4x16xf32>
    %216 = arith.negf %215 : vector<4x16xf32>
    %217 = math.exp %216 : vector<4x16xf32>
    %cst_69 = arith.constant 1.000000e+00 : f32
    %218 = vector.broadcast %cst_69 : f32 to vector<4x16xf32>
    %219 = arith.addf %218, %217 : vector<4x16xf32>
    %220 = arith.divf %218, %219 : vector<4x16xf32>
    %221 = arith.mulf %212, %119 : vector<4x16xf32>
    %222 = arith.mulf %206, %214 : vector<4x16xf32>
    %223 = arith.addf %221, %222 : vector<4x16xf32>
    %224 = math.tanh %223 : vector<4x16xf32>
    %225 = arith.mulf %220, %224 : vector<4x16xf32>
    %226 = arith.truncf %225 : vector<4x16xf32> to vector<4x16xbf16>
    %c0_70 = arith.constant 0 : index
    %c0_71 = arith.constant 0 : index
    %227 = vector.load %arg7[%c0_70, %c0_71] : memref<16x128xbf16, #tpu.memory_space<vmem>>, vector<16x128xbf16>
    %cst_72 = arith.constant dense<0.000000e+00> : vector<4x128xf32>
    %228 = tpu.matmul %226, %227, %cst_72 {dimension_numbers = #tpu.dot_dimension_numbers<[1], [0], [0], [1], [0, 0, 1, 1], [], []>} : vector<4x16xbf16>, vector<16x128xbf16>, vector<4x128xf32> -> vector<4x128xf32>
    %229 = vector.broadcast %1 : vector<1x128xf32> to vector<4x128xf32>
    %230 = arith.addf %228, %229 : vector<4x128xf32>
    %231 = arith.negf %230 : vector<4x128xf32>
    %232 = math.exp %231 : vector<4x128xf32>
    %cst_73 = arith.constant 1.000000e+00 : f32
    %233 = vector.broadcast %cst_73 : f32 to vector<4x128xf32>
    %234 = arith.addf %233, %232 : vector<4x128xf32>
    %235 = arith.divf %233, %234 : vector<4x128xf32>
    %c0_74 = arith.constant 0 : index
    %c0_75 = arith.constant 0 : index
    %236 = vector.load %arg9[%c0_74, %c0_75] : memref<4x128xf32, #tpu.memory_space<vmem>>, vector<4x128xf32>
    tpu.vector_store %arg9[%c0_74, %c0_75], %235 {strides = array<i32>} : memref<4x128xf32, #tpu.memory_space<vmem>>, vector<4x128xf32>,
    return
  }
}

</mosaic_0001>

<llo_original>
// kernel: geniepath_lazy_forward.1
$region0: #{geniepath_lazy_forward.1}
  #allocation0 [shape = 'u32[]', space=smem, size = 0x4, offset = 0x4, fixed_abs, tag = 'smem constant byte address 0x4 - core index']
  #allocation1 [shape = 'u32[72,128]{1,0:T(1,128)}', space=vmem, size = 0x9000, scoped, tag = 'internal scratch']
  %s0 = inlined_call_operand.vmem [shape: f32[16,8], index: 0, kind: input, shape index: {}]
  %s1 = inlined_call_operand.vmem [shape: s8[8,12], index: 1, kind: input, shape index: {}]
  %s2 = inlined_call_operand.vmem [shape: s8[4,8], index: 2, kind: input, shape index: {}]
  %s3 = inlined_call_operand.vmem [shape: bf16[8,16], index: 3, kind: input, shape index: {}]
  %s4 = inlined_call_operand.vmem [shape: bf16[16,36], index: 4, kind: input, shape index: {}]
  %s5 = inlined_call_operand.vmem [shape: bf16[2,16,18], index: 5, kind: input, shape index: {}]
  %s6 = inlined_call_operand.vmem [shape: bf16[2,32,64], index: 6, kind: input, shape index: {}]
  %s7 = inlined_call_operand.vmem [shape: bf16[16,128], index: 7, kind: input, shape index: {}]
  %s8 = inlined_call_operand.vmem [shape: f32[6,128], index: 8, kind: input, shape index: {}]
  %s9 = inlined_call_operand.vmem [shape: f32[4,128], index: 9, kind: output, shape index: {}]
  %s10 = sld [smem:[#allocation0]]
  $region46: #{geniepath_lazy_forward.1} parent=0
    _
  %s12 = ssub.s32 1, %s10
  %s13 = scalar_select 0, %s12, %s10
  // Predicated region
  $region2: #{geniepath_lazy_forward.1} parent=0 // pred_check
    _
  $region3: #{geniepath_lazy_forward.1} parent=0 // pred_check_branch
    %15 = sbr.rel (0) target = $region5
  $region4: #{geniepath_lazy_forward.1} parent=0 // pred_region
    _
  $region5: #{geniepath_lazy_forward.1} parent=0 // pred_fallthru
    _
  // Predicated region
  $region6: #{geniepath_lazy_forward.1} parent=0 // pred_check
    _
  $region7: #{geniepath_lazy_forward.1} parent=0 // pred_check_branch
    %17 = sbr.rel (0) target = $region9
  $region8: #{geniepath_lazy_forward.1} parent=0 // pred_region
    _
  $region9: #{geniepath_lazy_forward.1} parent=0 // pred_fallthru
    _
  // Predicated region
  $region10: #{geniepath_lazy_forward.1} parent=0 // pred_check
    _
  $region11: #{geniepath_lazy_forward.1} parent=0 // pred_check_branch
    %19 = sbr.rel (0) target = $region13
  $region12: #{geniepath_lazy_forward.1} parent=0 // pred_region
    _
  $region13: #{geniepath_lazy_forward.1} parent=0 // pred_fallthru
    _
  // Predicated region
  $region14: #{geniepath_lazy_forward.1} parent=0 // pred_check
    _
  $region15: #{geniepath_lazy_forward.1} parent=0 // pred_check_branch
    %21 = sbr.rel (0) target = $region17
  $region16: #{geniepath_lazy_forward.1} parent=0 // pred_region
    _
  $region17: #{geniepath_lazy_forward.1} parent=0 // pred_fallthru
    _
  // Predicated region
  $region18: #{geniepath_lazy_forward.1} parent=0 // pred_check
    _
  $region19: #{geniepath_lazy_forward.1} parent=0 // pred_check_branch
    %23 = sbr.rel (0) target = $region21
  $region20: #{geniepath_lazy_forward.1} parent=0 // pred_region
    _
  $region21: #{geniepath_lazy_forward.1} parent=0 // pred_fallthru
    _
  // Predicated region
  $region22: #{geniepath_lazy_forward.1} parent=0 // pred_check
    _
  $region23: #{geniepath_lazy_forward.1} parent=0 // pred_check_branch
    %25 = sbr.rel (0) target = $region25
  $region24: #{geniepath_lazy_forward.1} parent=0 // pred_region
    _
  $region25: #{geniepath_lazy_forward.1} parent=0 // pred_fallthru
    _
  // Predicated region
  $region26: #{geniepath_lazy_forward.1} parent=0 // pred_check
    _
  $region27: #{geniepath_lazy_forward.1} parent=0 // pred_check_branch
    %27 = sbr.rel (0) target = $region29
  $region28: #{geniepath_lazy_forward.1} parent=0 // pred_region
    _
  $region29: #{geniepath_lazy_forward.1} parent=0 // pred_fallthru
    _
  // Predicated region
  $region30: #{geniepath_lazy_forward.1} parent=0 // pred_check
    _
  $region31: #{geniepath_lazy_forward.1} parent=0 // pred_check_branch
    %29 = sbr.rel (0) target = $region33
  $region32: #{geniepath_lazy_forward.1} parent=0 // pred_region
    _
  $region33: #{geniepath_lazy_forward.1} parent=0 // pred_fallthru
    _
  // Predicated region
  $region34: #{geniepath_lazy_forward.1} parent=0 // pred_check
    _
  $region35: #{geniepath_lazy_forward.1} parent=0 // pred_check_branch
    %31 = sbr.rel (0) target = $region37
  $region36: #{geniepath_lazy_forward.1} parent=0 // pred_region
    _
  $region37: #{geniepath_lazy_forward.1} parent=0 // pred_fallthru
    _
  %v33 = vld [vmem:[%s8] sm:$0x1]
  %v34 = vld [vmem:[%s8 + $0x5] sm:$0x1]
  %v35 = vld [vmem:[%s0] sm:$0xff]
  %v36 = vld [vmem:[%s0 + $0x8] sm:$0xff]
  %v37 = vpack.c.bf16 %v36, %v35
  %v38 = vld [vmem:[%s3] sm:$0xf]
  %v39 = vperm.slane %v33, 0
  %vm40 = vcmask 64512
  %v42 = vsel %vm40, %v37, 0
  %vm44 = vcmask 1043456
  %v46 = vsel %vm44, %v38, 0
  %48 = vmatpush.bf16.msra.mxu0 0
  %49 = vmatpush.bf16.msra.mxu0 0
  %50 = vmatpush.bf16.msra.mxu0 0
  %51 = vmatpush.bf16.msra.mxu0 0
  %52 = vmatpush.bf16.msra.mxu0 0
  %53 = vmatpush.bf16.msra.mxu0 0
  %54 = vmatpush.bf16.msra.mxu0 0
  %55 = vmatpush.bf16.msra.mxu0 %v46
  %56 = vmatmul.bf16.gmra.mxu0 %v42
  %v57 = vpop.f32.mrf.mxu0
  %v58 = vadd.f32 %v39, %v57
  %v59 = vpop.f32.mrf.mxu0
  %v60 = vadd.f32 %v39, %v59
  %61 = vdwg.mxu0
  %v62 = vpack.c.bf16 %v60, %v58
  %v63 = vpack.c.bf16 %v60, %v60
  %v64 = vld [vmem:[%s4] sm:$0xf]
  %v65 = vld [vmem:[%s4 + $0x4] sm:$0xf]
  %v68 = vunpack.c.l.b16 %v64
  %v69 = vunpack.c.l.b16 %v65
  %v70 = vpack.c.b16 %v69, %v68
  %vm72 = vcmask 130048
  %v74 = vsel %vm72, %v62, 0
  %76 = vmatpush.bf16.msra.mxu0 0
  %77 = vmatpush.bf16.msra.mxu0 0
  %78 = vmatpush.bf16.msra.mxu0 0
  %79 = vmatpush.bf16.msra.mxu0 0
  %80 = vmatpush.bf16.msra.mxu0 0
  %81 = vmatpush.bf16.msra.mxu0 0
  %82 = vmatpush.bf16.msra.mxu0 0
  %83 = vmatpush.bf16.msra.mxu0 %v70
  %84 = vmatmul.bf16.gmra.mxu0 %v74
  %v85 = vpop.f32.mrf.mxu0
  %v86 = vadd.f32 0.0, %v85
  %v87 = vpop.f32.mrf.mxu0
  %v88 = vadd.f32 0.0, %v87
  %89 = vdwg.mxu0
  %v90 = vld [vmem:[%s1] sm:$0x3]
  %v91 = vunpack.c.0.s8 %v90
  %v92 = vcvt.s32.f32 %v91
  %v93 = vld [vmem:[%s2] sm:$0x1]
  %v94 = vunpack.c.0.s8 %v93
  %v95 = vcvt.s32.f32 %v94
  %v96 = vld [vmem:[%s8 + $0x1] sm:$0x1]
  %99 = vrot.lane.b32.xlu0 %v86, 112
  %v100 = vpop.permute.xlu0 %99
  %101 = vrot.lane.b32.xlu0 %v88, 112
  %v102 = vpop.permute.xlu0 %101
  %105 = vxpose.xlu0.b32.start [1/16] %v100, 128
  %106 = vxpose.xlu0.b32.cont [2/16] %v102, 128
  %107 = vxpose.xlu0.b32.cont [3/16] 0.0, 128
  %108 = vxpose.xlu0.b32.cont [4/16] 0.0, 128
  %109 = vxpose.xlu0.b32.cont [5/16] 0.0, 128
  %110 = vxpose.xlu0.b32.cont [6/16] 0.0, 128
  %111 = vxpose.xlu0.b32.cont [7/16] 0.0, 128
  %112 = vxpose.xlu0.b32.cont [8/16] 0.0, 128
  %113 = vxpose.xlu0.b32.cont [9/16] 0.0, 128
  %114 = vxpose.xlu0.b32.cont [10/16] 0.0, 128
  %115 = vxpose.xlu0.b32.cont [11/16] 0.0, 128
  %116 = vxpose.xlu0.b32.cont [12/16] 0.0, 128
  %117 = vxpose.xlu0.b32.cont [13/16] 0.0, 128
  %118 = vxpose.xlu0.b32.cont [14/16] 0.0, 128
  %119 = vxpose.xlu0.b32.cont [15/16] 0.0, 128
  %120 = vxpose.xlu0.b32.end [16/16] 0.0, 128
  %v121 = vpop.trf.xlu0
  %v122 = vpop.trf.xlu0
  %v123 = vpop.trf.xlu0
  %v124 = vpop.trf.xlu0
  %v125 = vpop.trf.xlu0
  %v126 = vpop.trf.xlu0
  %v127 = vpop.trf.xlu0
  %v128 = vpop.trf.xlu0
  %v129 = vpop.trf.xlu0
  %v130 = vpop.trf.xlu0
  %v131 = vpop.trf.xlu0
  %v132 = vpop.trf.xlu0
  %v133 = vpop.trf.xlu0
  %v134 = vpop.trf.xlu0
  %v135 = vpop.trf.xlu0
  %v136 = vpop.trf.xlu0
  %137 = vset.pattern.permute.xlu0 17
  %138 = vperm.xlu0 %137, %v86
  %v139 = vpop.permute.xlu0 %138
  %v141 = vperm.slane %v121, 0
  %v142 = vadd.f32 %v139, %v141
  %vm143 = vcmp.ge.f32.partialorder %v142, 0.0
  %v144 = vmul.f32 %v142, 0.2
  %v145 = vsel %vm143, %v142, %v144
  %vm146 = vcmp.gt.f32.partialorder %v92, 0.0
  %v147 = vsel %vm146, %v145, -1e+30
  %vm148 = vcmask 97280
  %v149 = vsel %vm148, %v147, -inf
  %150 = vmax.xlane.f32.xlu0 %v149
  %v151 = vpop.xlane.xlu0 %150
  %v152 = vsub.f32 %v147, %v151
  %v153 = vmul.f32 %v152, 1.442695
  %v154 = vpow.pop %v153
  %v155 = vsel %vm148, %v154, 0.0
  %156 = vadd.xlane.f32.xlu0 %v155
  %v157 = vpop.xlane.xlu0 %156
  %v158 = vrcp.pop %v157
  %v159 = vmul.f32 %v154, %v158
  %v160 = vpack.c.bf16 %v159, %v159
  %v161 = vpack.c.bf16 %v88, %v86
  %v162 = vperm.slane %v96, 0
  %v164 = vsel %vm148, %v160, 0
  %vm166 = vcmask 1045504
  %v168 = vsel %vm166, %v161, 0
  %170 = vmatpush.bf16.msra.mxu0 0
  %171 = vmatpush.bf16.msra.mxu0 0
  %172 = vmatpush.bf16.msra.mxu0 0
  %173 = vmatpush.bf16.msra.mxu0 0
  %174 = vmatpush.bf16.msra.mxu0 0
  %175 = vmatpush.bf16.msra.mxu0 0
  %176 = vmatpush.bf16.msra.mxu0 0
  %177 = vmatpush.bf16.msra.mxu0 %v168
  %178 = vmatmul.bf16.gmra.mxu0 %v164
  %v179 = vpop.f32.mrf.mxu0
  %v180 = vadd.f32 %v162, %v179
  %v181 = vpop.f32.mrf.mxu0
  %182 = vdwg.mxu0
  %v183 = vpack.c.bf16 %v180, %v180
  %v184 = vld [vmem:[%s5] sm:$0xf]
  %v185 = vld [vmem:[%s5 + $0x4] sm:$0xf]
  %v188 = vunpack.c.l.b16 %v184
  %v189 = vunpack.c.l.b16 %v185
  %v190 = vpack.c.b16 %v189, %v188
  %v193 = vsel %vm72, %v183, 0
  %195 = vmatpush.bf16.msra.mxu0 0
  %196 = vmatpush.bf16.msra.mxu0 0
  %197 = vmatpush.bf16.msra.mxu0 0
  %198 = vmatpush.bf16.msra.mxu0 0
  %199 = vmatpush.bf16.msra.mxu0 0
  %200 = vmatpush.bf16.msra.mxu0 0
  %201 = vmatpush.bf16.msra.mxu0 0
  %202 = vmatpush.bf16.msra.mxu0 %v190
  %203 = vmatmul.bf16.gmra.mxu0 %v193
  %v204 = vpop.f32.mrf.mxu0
  %v205 = vadd.f32 0.0, %v204
  %v206 = vpop.f32.mrf.mxu0
  %207 = vdwg.mxu0
  %209 = vrot.lane.b32.xlu0 %v205, 112
  %v210 = vpop.permute.xlu0 %209
  %212 = vxpose.xlu0.b32.start [1/16] %v210, 128
  %213 = vxpose.xlu0.b32.cont [2/16] 0.0, 128
  %214 = vxpose.xlu0.b32.cont [3/16] 0.0, 128
  %215 = vxpose.xlu0.b32.cont [4/16] 0.0, 128
  %216 = vxpose.xlu0.b32.cont [5/16] 0.0, 128
  %217 = vxpose.xlu0.b32.cont [6/16] 0.0, 128
  %218 = vxpose.xlu0.b32.cont [7/16] 0.0, 128
  %219 = vxpose.xlu0.b32.cont [8/16] 0.0, 128
  %220 = vxpose.xlu0.b32.cont [9/16] 0.0, 128
  %221 = vxpose.xlu0.b32.cont [10/16] 0.0, 128
  %222 = vxpose.xlu0.b32.cont [11/16] 0.0, 128
  %223 = vxpose.xlu0.b32.cont [12/16] 0.0, 128
  %224 = vxpose.xlu0.b32.cont [13/16] 0.0, 128
  %225 = vxpose.xlu0.b32.cont [14/16] 0.0, 128
  %226 = vxpose.xlu0.b32.cont [15/16] 0.0, 128
  %227 = vxpose.xlu0.b32.end [16/16] 0.0, 128
  %v228 = vpop.trf.xlu0
  %v229 = vpop.trf.xlu0
  %v230 = vpop.trf.xlu0
  %v231 = vpop.trf.xlu0
  %v232 = vpop.trf.xlu0
  %v233 = vpop.trf.xlu0
  %v234 = vpop.trf.xlu0
  %v235 = vpop.trf.xlu0
  %v236 = vpop.trf.xlu0
  %v237 = vpop.trf.xlu0
  %v238 = vpop.trf.xlu0
  %v239 = vpop.trf.xlu0
  %v240 = vpop.trf.xlu0
  %v241 = vpop.trf.xlu0
  %v242 = vpop.trf.xlu0
  %v243 = vpop.trf.xlu0
  %244 = vset.pattern.permute.xlu0 17
  %245 = vperm.xlu0 %244, %v205
  %v246 = vpop.permute.xlu0 %245
  %v248 = vperm.slane %v228, 0
  %v249 = vadd.f32 %v246, %v248
  %vm250 = vcmp.ge.f32.partialorder %v249, 0.0
  %v251 = vmul.f32 %v249, 0.2
  %v252 = vsel %vm250, %v249, %v251
  %vm253 = vcmp.gt.f32.partialorder %v95, 0.0
  %v254 = vsel %vm253, %v252, -1e+30
  %vm255 = vcmask 60416
  %v256 = vsel %vm255, %v254, -inf
  %257 = vmax.xlane.f32.xlu0 %v256
  %v258 = vpop.xlane.xlu0 %257
  %v259 = vsub.f32 %v254, %v258
  %v260 = vmul.f32 %v259, 1.442695
  %v261 = vpow.pop %v260
  %v262 = vsel %vm255, %v261, 0.0
  %263 = vadd.xlane.f32.xlu0 %v262
  %v264 = vpop.xlane.xlu0 %263
  %v265 = vrcp.pop %v264
  %v266 = vmul.f32 %v261, %v265
  %v267 = vpack.c.bf16 %v266, %v266
  %v268 = vpack.c.bf16 %v205, %v205
  %v270 = vsel %vm40, %v267, 0
  %v273 = vsel %vm44, %v268, 0
  %275 = vmatpush.bf16.msra.mxu0 0
  %276 = vmatpush.bf16.msra.mxu0 0
  %277 = vmatpush.bf16.msra.mxu0 0
  %278 = vmatpush.bf16.msra.mxu0 0
  %279 = vmatpush.bf16.msra.mxu0 0
  %280 = vmatpush.bf16.msra.mxu0 0
  %281 = vmatpush.bf16.msra.mxu0 0
  %282 = vmatpush.bf16.msra.mxu0 %v273
  %283 = vmatmul.bf16.gmra.mxu0 %v270
  %v284 = vpop.f32.mrf.mxu0
  %v285 = vadd.f32 %v162, %v284
  %v286 = vpop.f32.mrf.mxu0
  %287 = vdwg.mxu0
  %v288 = vld [vmem:[%s6] sm:$0xf]
  %v289 = vld [vmem:[%s6 + $0x4] sm:$0xf]
  %v290 = vld [vmem:[%s6 + $0x8] sm:$0xf]
  %v291 = vld [vmem:[%s6 + $0xc] sm:$0xf]
  %v292 = vpack.c.bf16 %v285, %v285
  %v294 = vrot.slane %v63, 2
  %v297 = vunpack.c.l.b16 %v290
  %v298 = vunpack.c.l.b16 %v291
  %v299 = vpack.c.b16 %v298, %v297
  %v302 = vsel %vm72, %v294, 0
  %304 = vmatpush.bf16.msra.mxu0 0
  %305 = vmatpush.bf16.msra.mxu0 0
  %306 = vmatpush.bf16.msra.mxu0 0
  %307 = vmatpush.bf16.msra.mxu0 0
  %308 = vmatpush.bf16.msra.mxu0 0
  %309 = vmatpush.bf16.msra.mxu0 0
  %310 = vmatpush.bf16.msra.mxu0 0
  %311 = vmatpush.bf16.msra.mxu0 %v299
  %312 = vmatmul.bf16.gmra.mxu0 %v302
  %v313 = vpop.f32.mrf.mxu0
  %v314 = vadd.f32 0.0, %v313
  %v315 = vpop.f32.mrf.mxu0
  %316 = vdwg.mxu0
  %v319 = vunpack.c.l.b16 %v288
  %v320 = vunpack.c.l.b16 %v289
  %v321 = vpack.c.b16 %v320, %v319
  %v324 = vsel %vm72, %v292, 0
  %326 = vmatpush.bf16.msra.mxu0 0
  %327 = vmatpush.bf16.msra.mxu0 0
  %328 = vmatpush.bf16.msra.mxu0 0
  %329 = vmatpush.bf16.msra.mxu0 0
  %330 = vmatpush.bf16.msra.mxu0 0
  %331 = vmatpush.bf16.msra.mxu0 0
  %332 = vmatpush.bf16.msra.mxu0 0
  %333 = vmatpush.bf16.msra.mxu0 %v321
  %334 = vmatmul.bf16.gmra.mxu0 %v324
  %v335 = vpop.f32.mrf.mxu0
  %v336 = vadd.f32 %v314, %v335
  %v337 = vpop.f32.mrf.mxu0
  %338 = vdwg.mxu0
  %v339 = vld [vmem:[%s8 + $0x3] sm:$0x1]
  %v340 = vperm.slane %v339, 0
  %v341 = vadd.f32 %v336, %v340
  %v342 = vxor.u32 %v341, 2147483648
  %v343 = vmul.f32 %v342, 1.442695
  %v344 = vpow.pop %v343
  %v345 = vadd.f32 %v344, 1.0
  %v346 = vrcp.pop %v345
  %v347 = vmul.f32 %v345, %v346
  %v348 = vsub.f32 1.0, %v347
  %v349 = vmul.f32 %v346, %v348
  %v350 = vadd.f32 %v346, %v349
  %vm351 = vweird.f32 %v345
  %vm352 = vweird.f32 %v346
  %vm353 = vmor %vm351, %vm352
  %v354 = vsel %vm353, %v346, %v350
  %v355 = vand.u32 2147483647, %v345
  %vm356 = vcmp.eq.f32.partialorder %v355, 8.507059e+37
  %v357 = vand.u32 %v345, 2147483648
  %v358 = vor.u32 1.1754944e-38, %v357
  %v359 = vsel %vm356, %v358, %v354
  %v360 = vmul.f32 1.0, %v359
  %v361 = vtanh.pop %v341
  %v362 = vmul.f32 %v360, 0.0
  %364 = vrot.lane.b32.xlu0 %v361, 96
  %v365 = vpop.permute.xlu0 %364
  %v367 = vmul.f32 %v360, %v365
  %369 = vrot.lane.b32.xlu0 %v367, 16
  %v370 = vpop.permute.xlu0 %369
  %v372 = vadd.f32 %v362, %v370
  %v373 = vtanh.pop %v372
  %375 = vrot.lane.b32.xlu0 %v373, 32
  %v376 = vpop.permute.xlu0 %375
  %v378 = vmul.f32 %v360, %v376
  %v379 = vld [vmem:[%s8 + $0x2] sm:$0x1]
  %380 = vrot.lane.b32.xlu0 %v86, 94
  %v381 = vpop.permute.xlu0 %380
  %382 = vrot.lane.b32.xlu0 %v88, 94
  %v383 = vpop.permute.xlu0 %382
  %386 = vxpose.xlu0.b32.start [1/16] %v381, 128
  %387 = vxpose.xlu0.b32.cont [2/16] %v383, 128
  %388 = vxpose.xlu0.b32.cont [3/16] 0.0, 128
  %389 = vxpose.xlu0.b32.cont [4/16] 0.0, 128
  %390 = vxpose.xlu0.b32.cont [5/16] 0.0, 128
  %391 = vxpose.xlu0.b32.cont [6/16] 0.0, 128
  %392 = vxpose.xlu0.b32.cont [7/16] 0.0, 128
  %393 = vxpose.xlu0.b32.cont [8/16] 0.0, 128
  %394 = vxpose.xlu0.b32.cont [9/16] 0.0, 128
  %395 = vxpose.xlu0.b32.cont [10/16] 0.0, 128
  %396 = vxpose.xlu0.b32.cont [11/16] 0.0, 128
  %397 = vxpose.xlu0.b32.cont [12/16] 0.0, 128
  %398 = vxpose.xlu0.b32.cont [13/16] 0.0, 128
  %399 = vxpose.xlu0.b32.cont [14/16] 0.0, 128
  %400 = vxpose.xlu0.b32.cont [15/16] 0.0, 128
  %401 = vxpose.xlu0.b32.end [16/16] 0.0, 128
  %v402 = vpop.trf.xlu0
  %v403 = vpop.trf.xlu0
  %v404 = vpop.trf.xlu0
  %v405 = vpop.trf.xlu0
  %v406 = vpop.trf.xlu0
  %v407 = vpop.trf.xlu0
  %v408 = vpop.trf.xlu0
  %v409 = vpop.trf.xlu0
  %v410 = vpop.trf.xlu0
  %v411 = vpop.trf.xlu0
  %v412 = vpop.trf.xlu0
  %v413 = vpop.trf.xlu0
  %v414 = vpop.trf.xlu0
  %v415 = vpop.trf.xlu0
  %v416 = vpop.trf.xlu0
  %v417 = vpop.trf.xlu0
  %418 = vset.pattern.permute.xlu0 35
  %419 = vperm.xlu0 %418, %v86
  %v420 = vpop.permute.xlu0 %419
  %v422 = vperm.slane %v402, 0
  %v423 = vadd.f32 %v420, %v422
  %vm424 = vcmp.ge.f32.partialorder %v423, 0.0
  %v425 = vmul.f32 %v423, 0.2
  %v426 = vsel %vm424, %v423, %v425
  %v427 = vsel %vm146, %v426, -1e+30
  %v428 = vsel %vm148, %v427, -inf
  %429 = vmax.xlane.f32.xlu0 %v428
  %v430 = vpop.xlane.xlu0 %429
  %v431 = vsub.f32 %v427, %v430
  %v432 = vmul.f32 %v431, 1.442695
  %v433 = vpow.pop %v432
  %v434 = vsel %vm148, %v433, 0.0
  %435 = vadd.xlane.f32.xlu0 %v434
  %v436 = vpop.xlane.xlu0 %435
  %v437 = vrcp.pop %v436
  %v438 = vmul.f32 %v433, %v437
  %v439 = vpack.c.bf16 %v438, %v438
  %v440 = vperm.slane %v379, 0
  %442 = vrot.lane.b32.xlu0 %v161, 110
  %v443 = vpop.permute.xlu0 %442
  %v445 = vsel %vm148, %v439, 0
  %v448 = vsel %vm166, %v443, 0
  %450 = vmatpush.bf16.msra.mxu0 0
  %451 = vmatpush.bf16.msra.mxu0 0
  %452 = vmatpush.bf16.msra.mxu0 0
  %453 = vmatpush.bf16.msra.mxu0 0
  %454 = vmatpush.bf16.msra.mxu0 0
  %455 = vmatpush.bf16.msra.mxu0 0
  %456 = vmatpush.bf16.msra.mxu0 0
  %457 = vmatpush.bf16.msra.mxu0 %v448
  %458 = vmatmul.bf16.gmra.mxu0 %v445
  %v459 = vpop.f32.mrf.mxu0
  %v460 = vadd.f32 %v440, %v459
  %v461 = vpop.f32.mrf.mxu0
  %462 = vdwg.mxu0
  %v463 = vpack.c.bf16 %v460, %v460
  %s464 = scalar_lea.vmem %s5, 8
  %v465 = vld [vmem:[%s464] sm:$0xf]
  %v466 = vld [vmem:[%s464 + $0x4] sm:$0xf]
  %v469 = vunpack.c.l.b16 %v465
  %v470 = vunpack.c.l.b16 %v466
  %v471 = vpack.c.b16 %v470, %v469
  %v474 = vsel %vm72, %v463, 0
  %476 = vmatpush.bf16.msra.mxu0 0
  %477 = vmatpush.bf16.msra.mxu0 0
  %478 = vmatpush.bf16.msra.mxu0 0
  %479 = vmatpush.bf16.msra.mxu0 0
  %480 = vmatpush.bf16.msra.mxu0 0
  %481 = vmatpush.bf16.msra.mxu0 0
  %482 = vmatpush.bf16.msra.mxu0 0
  %483 = vmatpush.bf16.msra.mxu0 %v471
  %484 = vmatmul.bf16.gmra.mxu0 %v474
  %v485 = vpop.f32.mrf.mxu0
  %v486 = vadd.f32 0.0, %v485
  %v487 = vpop.f32.mrf.mxu0
  %488 = vdwg.mxu0
  %490 = vrot.lane.b32.xlu0 %v486, 112
  %v491 = vpop.permute.xlu0 %490
  %493 = vxpose.xlu0.b32.start [1/16] %v491, 128
  %494 = vxpose.xlu0.b32.cont [2/16] 0.0, 128
  %495 = vxpose.xlu0.b32.cont [3/16] 0.0, 128
  %496 = vxpose.xlu0.b32.cont [4/16] 0.0, 128
  %497 = vxpose.xlu0.b32.cont [5/16] 0.0, 128
  %498 = vxpose.xlu0.b32.cont [6/16] 0.0, 128
  %499 = vxpose.xlu0.b32.cont [7/16] 0.0, 128
  %500 = vxpose.xlu0.b32.cont [8/16] 0.0, 128
  %501 = vxpose.xlu0.b32.cont [9/16] 0.0, 128
  %502 = vxpose.xlu0.b32.cont [10/16] 0.0, 128
  %503 = vxpose.xlu0.b32.cont [11/16] 0.0, 128
  %504 = vxpose.xlu0.b32.cont [12/16] 0.0, 128
  %505 = vxpose.xlu0.b32.cont [13/16] 0.0, 128
  %506 = vxpose.xlu0.b32.cont [14/16] 0.0, 128
  %507 = vxpose.xlu0.b32.cont [15/16] 0.0, 128
  %508 = vxpose.xlu0.b32.end [16/16] 0.0, 128
  %v509 = vpop.trf.xlu0
  %v510 = vpop.trf.xlu0
  %v511 = vpop.trf.xlu0
  %v512 = vpop.trf.xlu0
  %v513 = vpop.trf.xlu0
  %v514 = vpop.trf.xlu0
  %v515 = vpop.trf.xlu0
  %v516 = vpop.trf.xlu0
  %v517 = vpop.trf.xlu0
  %v518 = vpop.trf.xlu0
  %v519 = vpop.trf.xlu0
  %v520 = vpop.trf.xlu0
  %v521 = vpop.trf.xlu0
  %v522 = vpop.trf.xlu0
  %v523 = vpop.trf.xlu0
  %v524 = vpop.trf.xlu0
  %525 = vset.pattern.permute.xlu0 17
  %526 = vperm.xlu0 %525, %v486
  %v527 = vpop.permute.xlu0 %526
  %v529 = vperm.slane %v509, 0
  %v530 = vadd.f32 %v527, %v529
  %vm531 = vcmp.ge.f32.partialorder %v530, 0.0
  %v532 = vmul.f32 %v530, 0.2
  %v533 = vsel %vm531, %v530, %v532
  %v534 = vsel %vm253, %v533, -1e+30
  %v535 = vsel %vm255, %v534, -inf
  %536 = vmax.xlane.f32.xlu0 %v535
  %v537 = vpop.xlane.xlu0 %536
  %v538 = vsub.f32 %v534, %v537
  %v539 = vmul.f32 %v538, 1.442695
  %v540 = vpow.pop %v539
  %v541 = vsel %vm255, %v540, 0.0
  %542 = vadd.xlane.f32.xlu0 %v541
  %v543 = vpop.xlane.xlu0 %542
  %v544 = vrcp.pop %v543
  %v545 = vmul.f32 %v540, %v544
  %v546 = vpack.c.bf16 %v545, %v545
  %v547 = vpack.c.bf16 %v486, %v486
  %v549 = vsel %vm40, %v546, 0
  %v552 = vsel %vm44, %v547, 0
  %554 = vmatpush.bf16.msra.mxu0 0
  %555 = vmatpush.bf16.msra.mxu0 0
  %556 = vmatpush.bf16.msra.mxu0 0
  %557 = vmatpush.bf16.msra.mxu0 0
  %558 = vmatpush.bf16.msra.mxu0 0
  %559 = vmatpush.bf16.msra.mxu0 0
  %560 = vmatpush.bf16.msra.mxu0 0
  %561 = vmatpush.bf16.msra.mxu0 %v552
  %562 = vmatmul.bf16.gmra.mxu0 %v549
  %v563 = vpop.f32.mrf.mxu0
  %v564 = vadd.f32 %v440, %v563
  %v565 = vpop.f32.mrf.mxu0
  %566 = vdwg.mxu0
  %s567 = scalar_lea.vmem %s6, 16
  %v568 = vld [vmem:[%s567] sm:$0xf]
  %v569 = vld [vmem:[%s567 + $0x4] sm:$0xf]
  %v570 = vld [vmem:[%s567 + $0x8] sm:$0xf]
  %v571 = vld [vmem:[%s567 + $0xc] sm:$0xf]
  %v572 = vpack.c.bf16 %v378, %v378
  %v573 = vpack.c.bf16 %v564, %v564
  %575 = vrot.lane.b32.xlu0 %v572, 80
  %v576 = vpop.permute.xlu0 %575
  %v579 = vunpack.c.l.b16 %v570
  %v580 = vunpack.c.l.b16 %v571
  %v581 = vpack.c.b16 %v580, %v579
  %v584 = vsel %vm72, %v576, 0
  %586 = vmatpush.bf16.msra.mxu0 0
  %587 = vmatpush.bf16.msra.mxu0 0
  %588 = vmatpush.bf16.msra.mxu0 0
  %589 = vmatpush.bf16.msra.mxu0 0
  %590 = vmatpush.bf16.msra.mxu0 0
  %591 = vmatpush.bf16.msra.mxu0 0
  %592 = vmatpush.bf16.msra.mxu0 0
  %593 = vmatpush.bf16.msra.mxu0 %v581
  %594 = vmatmul.bf16.gmra.mxu0 %v584
  %v595 = vpop.f32.mrf.mxu0
  %v596 = vadd.f32 0.0, %v595
  %v597 = vpop.f32.mrf.mxu0
  %598 = vdwg.mxu0
  %v601 = vunpack.c.l.b16 %v568
  %v602 = vunpack.c.l.b16 %v569
  %v603 = vpack.c.b16 %v602, %v601
  %v606 = vsel %vm72, %v573, 0
  %608 = vmatpush.bf16.msra.mxu0 0
  %609 = vmatpush.bf16.msra.mxu0 0
  %610 = vmatpush.bf16.msra.mxu0 0
  %611 = vmatpush.bf16.msra.mxu0 0
  %612 = vmatpush.bf16.msra.mxu0 0
  %613 = vmatpush.bf16.msra.mxu0 0
  %614 = vmatpush.bf16.msra.mxu0 0
  %615 = vmatpush.bf16.msra.mxu0 %v603
  %616 = vmatmul.bf16.gmra.mxu0 %v606
  %v617 = vpop.f32.mrf.mxu0
  %v618 = vadd.f32 %v596, %v617
  %v619 = vpop.f32.mrf.mxu0
  %620 = vdwg.mxu0
  %v621 = vld [vmem:[%s8 + $0x4] sm:$0x1]
  %v622 = vperm.slane %v621, 0
  %v623 = vadd.f32 %v618, %v622
  %v624 = vxor.u32 %v623, 2147483648
  %v625 = vmul.f32 %v624, 1.442695
  %v626 = vpow.pop %v625
  %v627 = vadd.f32 %v626, 1.0
  %v628 = vrcp.pop %v627
  %v629 = vmul.f32 %v627, %v628
  %v630 = vsub.f32 1.0, %v629
  %v631 = vmul.f32 %v628, %v630
  %v632 = vadd.f32 %v628, %v631
  %vm633 = vweird.f32 %v627
  %vm634 = vweird.f32 %v628
  %vm635 = vmor %vm633, %vm634
  %v636 = vsel %vm635, %v628, %v632
  %v637 = vand.u32 2147483647, %v627
  %vm638 = vcmp.eq.f32.partialorder %v637, 8.507059e+37
  %v639 = vand.u32 %v627, 2147483648
  %v640 = vor.u32 1.1754944e-38, %v639
  %v641 = vsel %vm638, %v640, %v636
  %v642 = vmul.f32 1.0, %v641
  %v643 = vtanh.pop %v623
  %v644 = vmul.f32 %v642, %v372
  %646 = vrot.lane.b32.xlu0 %v643, 96
  %v647 = vpop.permute.xlu0 %646
  %v649 = vmul.f32 %v642, %v647
  %651 = vrot.lane.b32.xlu0 %v649, 16
  %v652 = vpop.permute.xlu0 %651
  %v654 = vadd.f32 %v644, %v652
  %v655 = vtanh.pop %v654
  %657 = vrot.lane.b32.xlu0 %v655, 32
  %v658 = vpop.permute.xlu0 %657
  %v660 = vmul.f32 %v642, %v658
  %v661 = vpack.c.bf16 %v660, %v660
  %v662 = vld [vmem:[%s7] sm:$0xf]
  %v663 = vld [vmem:[%s7 + $0x4] sm:$0xf]
  %v664 = vperm.slane %v34, 0
  %666 = vrot.lane.b32.xlu0 %v661, 80
  %v667 = vpop.permute.xlu0 %666
  %v670 = vunpack.c.l.b16 %v662
  %v671 = vunpack.c.l.b16 %v663
  %v672 = vpack.c.b16 %v671, %v670
  %v675 = vsel %vm72, %v667, 0
  %677 = vmatpush.bf16.msra.mxu0 0
  %678 = vmatpush.bf16.msra.mxu0 0
  %679 = vmatpush.bf16.msra.mxu0 0
  %680 = vmatpush.bf16.msra.mxu0 0
  %681 = vmatpush.bf16.msra.mxu0 0
  %682 = vmatpush.bf16.msra.mxu0 0
  %683 = vmatpush.bf16.msra.mxu0 0
  %684 = vmatpush.bf16.msra.mxu0 %v672
  %685 = vmatmul.bf16.gmra.mxu0 %v675
  %v686 = vpop.f32.mrf.mxu0
  %v687 = vadd.f32 %v664, %v686
  %v688 = vpop.f32.mrf.mxu0
  %689 = vdwg.mxu0
  %v690 = vxor.u32 %v687, 2147483648
  %v691 = vmul.f32 %v690, 1.442695
  %v692 = vpow.pop %v691
  %v693 = vadd.f32 %v692, 1.0
  %v694 = vrcp.pop %v693
  %v695 = vmul.f32 %v693, %v694
  %v696 = vsub.f32 1.0, %v695
  %v697 = vmul.f32 %v694, %v696
  %v698 = vadd.f32 %v694, %v697
  %vm699 = vweird.f32 %v693
  %vm700 = vweird.f32 %v694
  %vm701 = vmor %vm699, %vm700
  %v702 = vsel %vm701, %v694, %v698
  %v703 = vand.u32 2147483647, %v693
  %vm704 = vcmp.eq.f32.partialorder %v703, 8.507059e+37
  %v705 = vand.u32 %v693, 2147483648
  %v706 = vor.u32 1.1754944e-38, %v705
  %v707 = vsel %vm704, %v706, %v702
  %v708 = vmul.f32 1.0, %v707
  %709 = vst [vmem:[%s9] sm:$0xf] %v708
  // Predicated region
  $region38: #{geniepath_lazy_forward.1} parent=0 // pred_check
    _
  $region39: #{geniepath_lazy_forward.1} parent=0 // pred_check_branch
    %711 = sbr.rel (0) target = $region41
  $region40: #{geniepath_lazy_forward.1} parent=0 // pred_region
    _
  $region41: #{geniepath_lazy_forward.1} parent=0 // pred_fallthru
    _
  // Predicated region
  $region42: #{geniepath_lazy_forward.1} parent=0 // pred_check
    _
  $region43: #{geniepath_lazy_forward.1} parent=0 // pred_check_branch
    %713 = sbr.rel (0) target = $region45
  $region44: #{geniepath_lazy_forward.1} parent=0 // pred_region
    _
  $region45: #{geniepath_lazy_forward.1} parent=0 // pred_fallthru
    _

</llo_original>
